<compile_context>
chip_gen: v7x
topology: tpu7x:2x2x1
jax: 0.10.0
libtpu: 0.0.40
codegen_flags: <defaults>
</compile_context>

<pallas_src>
import jax
import jax.numpy as jnp
import numpy as np
from jax import lax
from jax.experimental import pallas as pl
from jax.experimental.pallas import tpu as pltpu

C_OUT = 64
KSIZE = 3
MAX_SPATIAL_TILE = 16384         # lanes per grid step (multiple of 512); see VMEM budget above


# ----------------------------------------------------------------------------
# Kernels
# ----------------------------------------------------------------------------
def radar_kernel(t_ref, w_ref, b_ref, o_ref):
    """Fused Conv2d(1->64, 3x3, p=1) + ReLU + MaxPool2d(2) for one spatial tile.

    t_ref: (1, 16, NT)   bf16  tap bank (16 decimated slices, spatial on lanes)
    w_ref: (4*64, 16)    bf16  per-pool-offset conv weights (zero-padded 4x4)
    b_ref: (64, 1)       f32   conv bias (channels on sublanes)
    o_ref: (1, 64, NT)   bf16  pooled features, channels x flat-spatial
    """
    # Single MXU call covering all 4 pool offsets x 64 channels.
    z = jnp.dot(w_ref[...], t_ref[0], preferred_element_type=jnp.float32)
    # MaxPool2d(2) == elementwise max over the four pool-offset slabs (VPU).
    m = jnp.maximum(jnp.maximum(z[0:C_OUT], z[C_OUT:2 * C_OUT]),
                    jnp.maximum(z[2 * C_OUT:3 * C_OUT], z[3 * C_OUT:4 * C_OUT]))
    # Bias + ReLU once, after the max (exact reorder); f32 math, bf16 only on
    # the final store (dominant HBM stream -> halve it).
    o_ref[0] = jnp.maximum(m + b_ref[...], 0.0).astype(o_ref.dtype)


def fusion_kernel(x_ref, w_ref, b_ref, o_ref):
    """fusion_layer: y = x @ W_t + b with W_t already in (in, out) layout."""
    o_ref[...] = jnp.dot(x_ref[...], w_ref[...],
                         preferred_element_type=jnp.float32) + b_ref[...]


# ----------------------------------------------------------------------------
# Wrappers
# ----------------------------------------------------------------------------
def _spatial_tile(n):
    """Lane tile: whole extent if it fits, else a fixed multiple-of-128 tile.

    The trailing partial block (when MAX_SPATIAL_TILE does not divide n) is
    edge-masked by Pallas, so no frame size can force an untileable block.
    """
    return n if n <= MAX_SPATIAL_TILE else MAX_SPATIAL_TILE


def _prep_radar_weights(w_conv, b_conv):
    """Conv weight (64,1,3,3) -> fused (256,16) bf16 matrix; bias -> (64,1) f32.

    Row (2a+b)*64+c, column 4t+u holds w[c, t-a, u-b] when that tap exists for
    pool offset (a, b), else 0 -- so one matmul against the 16-slice tap bank
    produces the conv output for all four positions of each 2x2 pooling window.
    """
    w2 = w_conv.reshape(C_OUT, KSIZE, KSIZE).astype(jnp.float32)
    wbig = jnp.zeros((2, 2, C_OUT, 4, 4), dtype=jnp.float32)
    for a in range(2):
        for b in range(2):
            wbig = wbig.at[a, b, :, a:a + KSIZE, b:b + KSIZE].set(w2)
    wbig = wbig.reshape(4 * C_OUT, 16).astype(jnp.bfloat16)
    return wbig, b_conv.reshape(C_OUT, 1).astype(jnp.float32)


def radar_feature_extractor(radar, w_conv, b_conv):
    """radar: (B,1,H,W) NCHW -> (B,64,H//2,W//2) NCHW bf16 (matches PyTorch math)."""
    B, c_in, H, W = radar.shape
    assert c_in == 1 and H % 2 == 0 and W % 2 == 0
    ph, pw = H // 2, W // 2
    n = ph * pw
    nt = _spatial_tile(n)

    # Deduplicated tap bank: T[:, 4*t+u, i*pw+j] = x_pad[:, 2*i+t, 2*j+u].
    # bf16 taps (K is only 16; use f32 taps here if radar dynamic range demands it).
    x_pad = jnp.pad(radar[:, 0].astype(jnp.bfloat16),
                    ((0, 0), (1, 1), (1, 1)))                     # (B, H+2, W+2)
    taps = [x_pad[:, t:t + 2 * ph:2, u:u + 2 * pw:2]
            for t in range(4) for u in range(4)]                  # 16 x (B, ph, pw)
    tap_bank = jnp.stack(taps, axis=1).reshape(B, 16, n)          # (B, 16, n) bf16

    wbig, b_col = _prep_radar_weights(w_conv, b_conv)

    out_flat = pl.pallas_call(
        radar_kernel,
        out_shape=jax.ShapeDtypeStruct((B, C_OUT, n), jnp.bfloat16),
        grid_spec=pltpu.PrefetchScalarGridSpec(
            num_scalar_prefetch=0,
            grid=(B, pl.cdiv(n, nt)),
            in_specs=[
                pl.BlockSpec((1, 16, nt), lambda b, s: (b, 0, s)),
                pl.BlockSpec((4 * C_OUT, 16), lambda b, s: (0, 0)),
                pl.BlockSpec((C_OUT, 1), lambda b, s: (0, 0)),
            ],
            out_specs=pl.BlockSpec((1, C_OUT, nt), lambda b, s: (b, 0, s)),
        ),
        compiler_params=pltpu.CompilerParams(
            dimension_semantics=("parallel", "parallel"),
            vmem_limit_bytes=32 * 1024 * 1024),
    )(tap_bank, wbig, b_col)

    # Free row-major reshape back to NCHW -- no transpose pass.
    return out_flat.reshape(B, C_OUT, ph, pw)


def fusion_layer(fused, w_fc, b_fc):
    """fused: (B, 3*512) -> (B, 128).  w_fc arrives in PyTorch (128, 1536) layout."""
    # TODO(synk): at tiny batch this standalone pallas_call is dispatch/weight-DMA
    # bound; in a full model fold it into the producer of `fused` (or use jnp.dot)
    # and only keep this Pallas path for B >~ 128.
    B, F = fused.shape
    out_dim = w_fc.shape[0]
    # One-time prep (would live at parameter-load time in a real model):
    # pre-transpose to (in, out) so the kernel needs no in-kernel relayout, and
    # bf16 halves the dominant weight DMA.
    w_t = jnp.asarray(w_fc).T.astype(jnp.bfloat16)                # (F, out_dim)
    x_bf = fused.astype(jnp.bfloat16)
    return pl.pallas_call(
        fusion_kernel,
        out_shape=jax.ShapeDtypeStruct((B, out_dim), jnp.float32),
        grid_spec=pltpu.PrefetchScalarGridSpec(
            num_scalar_prefetch=0,
            grid=(1,),
            in_specs=[
                pl.BlockSpec((B, F), lambda i: (0, 0)),
                pl.BlockSpec((F, out_dim), lambda i: (0, 0)),
                pl.BlockSpec((1, out_dim), lambda i: (0, 0)),
            ],
            out_specs=pl.BlockSpec((B, out_dim), lambda i: (0, 0)),
        ),
    )(x_bf, w_t, b_fc.reshape(1, -1).astype(jnp.float32))


def network_forward(images, lidar_data, radar_data, params, model_mode=0):
    if model_mode == 2:
        return radar_feature_extractor(
            radar_data, params["conv_w"], params["conv_b"])
    # TODO(synk): `base_detector` is an external module and
    # `lidar_feature_extractor` is never defined in __init__, so
    # model_mode 0/1 of the reference module cannot be reproduced.
    raise NotImplementedError("only model_mode=2 (radar path) is implementable")


# ----------------------------------------------------------------------------
# Main
# ----------------------------------------------------------------------------
if __name__ == "__main__":
    key = jax.random.PRNGKey(0)
    k_rad, k_cw, k_cb, k_fw, k_fb, k_fx = jax.random.split(key, 6)

    B, H, W = 2, 16, 16
    radar = jax.random.normal(k_rad, (B, 1, H, W), dtype=jnp.float32)

    # Deterministic parameter init (PyTorch-style uniform bounds).
    kc = 1.0 / np.sqrt(1 * KSIZE * KSIZE)
    conv_w = jax.random.uniform(k_cw, (C_OUT, 1, KSIZE, KSIZE),
                                minval=-kc, maxval=kc, dtype=jnp.float32)
    conv_b = jax.random.uniform(k_cb, (C_OUT,), minval=-kc, maxval=kc,
                                dtype=jnp.float32)
    kf = 1.0 / np.sqrt(3 * 512)
    fc_w = jax.random.uniform(k_fw, (128, 3 * 512), minval=-kf, maxval=kf,
                              dtype=jnp.float32)
    fc_b = jax.random.uniform(k_fb, (128,), minval=-kf, maxval=kf,
                              dtype=jnp.float32)
    params = {"conv_w": conv_w, "conv_b": conv_b, "fc_w": fc_w, "fc_b": fc_b}

    # --- radar path (model_mode=2), the module's defined hot path -----------
    radar_feats = network_forward(None, None, radar, params, model_mode=2)
    radar_feats = jax.block_until_ready(radar_feats)
    assert radar_feats.shape == (B, C_OUT, H // 2, W // 2)

    # reference: XLA conv + relu + maxpool, NCHW, f32
    ref = lax.conv_general_dilated(
        radar, conv_w, window_strides=(1, 1), padding=((1, 1), (1, 1)),
        dimension_numbers=("NCHW", "OIHW", "NCHW"))
    ref = jnp.maximum(ref + conv_b[None, :, None, None], 0.0)
    ref = lax.reduce_window(ref, -jnp.inf, lax.max,
                            (1, 1, 2, 2), (1, 1, 2, 2), "VALID")
    # bf16 MXU operands + bf16 output store vs f32 reference -> loose tolerance.
    assert np.allclose(np.asarray(radar_feats.astype(jnp.float32)),
                       np.asarray(ref), rtol=3e-2, atol=3e-2)

    # --- fusion_layer Linear(3*512, 128) on synthetic fused features --------
    fused = jax.random.normal(k_fx, (B, 3 * 512), dtype=jnp.float32)
    out = jax.block_until_ready(fusion_layer(fused, fc_w, fc_b))
    ref_fc = fused @ fc_w.T + fc_b
    assert out.shape == (B, 128)
    assert np.allclose(np.asarray(out), np.asarray(ref_fc),
                       rtol=2e-2, atol=2e-2)

    print("KERNEL_OK")
</pallas_src>

<mosaic_0001>
module attributes {stable_mosaic.version = 11 : i64} {
  func.func @radar_kernel(%arg0: i32, %arg1: i32, %arg2: memref<1x16x64xbf16, #tpu.memory_space<vmem>>, %arg3: memref<256x16xbf16, #tpu.memory_space<vmem>>, %arg4: memref<64x1xf32, #tpu.memory_space<vmem>>, %arg5: memref<1x64x64xbf16, #tpu.memory_space<vmem>>) attributes {dimension_semantics = [#tpu.dimension_semantics<parallel>, #tpu.dimension_semantics<parallel>], iteration_bounds = array<i64: 2, 1>, scalar_prefetch = 0 : i64, scratch_operands = 0 : i64, tpu.core_type = #tpu.core_type<tc>, window_params = [{transform_indices = @transform_0, window_bounds = array<i64: 1, 16, 64>}, {pipeline_mode = #tpu.pipeline_mode<synchronous>, transform_indices = @transform_1, window_bounds = array<i64: 256, 16>}, {pipeline_mode = #tpu.pipeline_mode<synchronous>, transform_indices = @transform_2, window_bounds = array<i64: 64, 1>}, {transform_indices = @transform_3, window_bounds = array<i64: 1, 64, 64>}]} {
    %c0 = arith.constant 0 : index
    %c0_0 = arith.constant 0 : index
    %0 = vector.load %arg3[%c0, %c0_0] : memref<256x16xbf16, #tpu.memory_space<vmem>>, vector<256x16xbf16>
    %c0_1 = arith.constant 0 : index
    %c0_2 = arith.constant 0 : index
    %c0_3 = arith.constant 0 : index
    %1 = vector.load %arg2[%c0_1, %c0_2, %c0_3] : memref<1x16x64xbf16, #tpu.memory_space<vmem>>, vector<1x16x64xbf16>
    %2 = vector.shape_cast %1 : vector<1x16x64xbf16> to vector<16x64xbf16>
    %cst = arith.constant dense<0.000000e+00> : vector<256x64xf32>
    %3 = tpu.matmul %0, %2, %cst {dimension_numbers = #tpu.dot_dimension_numbers<[1], [0], [0], [1], [0, 0, 1, 1], [], []>} : vector<256x16xbf16>, vector<16x64xbf16>, vector<256x64xf32> -> vector<256x64xf32>
    %4 = vector.extract_strided_slice %3 {offsets = [0, 0], sizes = [64, 64], strides = [1, 1]} : vector<256x64xf32> to vector<64x64xf32>
    %5 = vector.extract_strided_slice %3 {offsets = [64, 0], sizes = [64, 64], strides = [1, 1]} : vector<256x64xf32> to vector<64x64xf32>
    %6 = arith.maximumf %4, %5 : vector<64x64xf32>
    %7 = vector.extract_strided_slice %3 {offsets = [128, 0], sizes = [64, 64], strides = [1, 1]} : vector<256x64xf32> to vector<64x64xf32>
    %8 = vector.extract_strided_slice %3 {offsets = [192, 0], sizes = [64, 64], strides = [1, 1]} : vector<256x64xf32> to vector<64x64xf32>
    %9 = arith.maximumf %7, %8 : vector<64x64xf32>
    %10 = arith.maximumf %6, %9 : vector<64x64xf32>
    %c0_4 = arith.constant 0 : index
    %c0_5 = arith.constant 0 : index
    %11 = vector.load %arg4[%c0_4, %c0_5] : memref<64x1xf32, #tpu.memory_space<vmem>>, vector<64x1xf32>
    %12 = vector.broadcast %11 : vector<64x1xf32> to vector<64x64xf32>
    %13 = arith.addf %10, %12 : vector<64x64xf32>
    %cst_6 = arith.constant 0.000000e+00 : f32
    %14 = vector.broadcast %cst_6 : f32 to vector<64x64xf32>
    %15 = arith.maximumf %13, %14 : vector<64x64xf32>
    %16 = arith.truncf %15 : vector<64x64xf32> to vector<64x64xbf16>
    %c0_7 = arith.constant 0 : index
    %c0_8 = arith.constant 0 : index
    %c0_9 = arith.constant 0 : index
    %17 = vector.load %arg5[%c0_7, %c0_8, %c0_9] : memref<1x64x64xbf16, #tpu.memory_space<vmem>>, vector<1x64x64xbf16>
    %18 = vector.shape_cast %17 : vector<1x64x64xbf16> to vector<64x64xbf16>
    %19 = vector.shape_cast %16 : vector<64x64xbf16> to vector<1x64x64xbf16>
    tpu.vector_store %arg5[%c0_7, %c0_8, %c0_9], %19 {strides = array<i32>} : memref<1x64x64xbf16, #tpu.memory_space<vmem>>, vector<1x64x64xbf16>,
    return
  }
  func.func @transform_0(%arg0: i32, %arg1: i32) -> (i32, i32, i32) {
    %c0_i32 = arith.constant 0 : i32
    %c0_i32_0 = arith.constant 0 : i32
    return %arg0, %c0_i32, %arg1 : i32, i32, i32
  }
  func.func @transform_1(%arg0: i32, %arg1: i32) -> (i32, i32) {
    %c0_i32 = arith.constant 0 : i32
    %c0_i32_0 = arith.constant 0 : i32
    %c0_i32_1 = arith.constant 0 : i32
    return %c0_i32, %c0_i32_0 : i32, i32
  }
  func.func @transform_2(%arg0: i32, %arg1: i32) -> (i32, i32) {
    %c0_i32 = arith.constant 0 : i32
    %c0_i32_0 = arith.constant 0 : i32
    %c0_i32_1 = arith.constant 0 : i32
    return %c0_i32, %c0_i32_0 : i32, i32
  }
  func.func @transform_3(%arg0: i32, %arg1: i32) -> (i32, i32, i32) {
    %c0_i32 = arith.constant 0 : i32
    %c0_i32_0 = arith.constant 0 : i32
    return %arg0, %c0_i32, %arg1 : i32, i32, i32
  }
}

</mosaic_0001>

<llo_original>
// kernel: tpu_custom_call.1
$region0: #{tpu_custom_call.1}
  #allocation0 [shape = 'u32[]', space=smem, size = 0x4, offset = 0x4, fixed_abs, tag = 'smem constant byte address 0x4 - core index']
  #allocation1 [shape = 'u32[144,128]{1,0:T(1,128)}', space=vmem, size = 0x12000, scoped, tag = 'internal scratch']
  %s0 = inlined_call_operand.vmem [shape: bf16[2,16,64], index: 0, kind: input, shape index: {}]
  %s1 = inlined_call_operand.vmem [shape: bf16[256,16], index: 1, kind: input, shape index: {}]
  %s2 = inlined_call_operand.vmem [shape: f32[64,1], index: 2, kind: input, shape index: {}]
  %s3 = inlined_call_operand.hbm [shape: bf16[2,64,64], index: 3, kind: output, shape index: {}]
  %s4 = sld [smem:[#allocation0]]
  $region45: #{tpu_custom_call.1} parent=0
    _
  %s6 = ssub.s32 1, %s4
  %s7 = scalar_select 0, %s6, %s4
  $region1: #{tpu_custom_call.1} parent=0
    #allocation2 [shape = 'u8[32768]{0}', space=vmem, size = 0x8000, scoped, tag = 'output window, operand 0']
    #allocation3 [shape = 's32[2]{0}', space=sflag, size = 0x8, scoped, tag = 'scoped memory for tpu_custom_call.1']
    %8 = vsyncpa [#allocation3], 0
    %s9 = scalar_lea.sflag [#allocation3], 1
    %10 = vsyncpa %s9, 0
    loop: start=0, step=1, limit=4
    $region2: #{tpu_custom_call.1} parent=1 // loop_pre_header
      _
    $region3: #{tpu_custom_call.1} parent=1 // loop_header
      %s12 = sphi 0, %s16
      %p13 = scmp.ge.s32.totalorder %s12, 4
      %s19 = sphi 0, %s31
      %s20 = sphi 0, %s27
      %s21 = sphi 0, %s19
      %s22 = sphi 0, %s20
      %s23 = sphi 0, %s21
      %s24 = sphi 0, %s22
      %s36 = sphi 0, %s38
      %s39 = sphi 0, %s36
      %s40 = sphi 0, %s39
      %s56 = sphi 0, %s40
      %s60 = sphi 0, %s60
      %s62 = sphi 0, %s60
      %s63 = sphi 0, %s62
      %s77 = sphi 0, %s63
      %s81 = sphi 0, %s81
      %s83 = sphi 0, %s81
      %s84 = sphi 0, %s83
      %s98 = sphi 0, %s84
      %s106 = sphi 0, %s108
      %s109 = sphi 0, %s106
      %s110 = sphi 0, %s109
      %s126 = sphi 0, %s110
    $region4: #{tpu_custom_call.1} parent=1 // loop_header_branch
      %15 = sbr.rel (%p13) target = $region8
    $region5: #{tpu_custom_call.1} parent=1 // loop_body
      %s17 = ssub.s32 %s12, 1
      %s18 = ssub.s32 %s12, 2
      %s25 = sadd.s32 1, %s20
      %p26 = scmp.ge.s32.totalorder %s25, 1
      %s27 = scalar_select %p26, 0, %s25
      %s28 = sadd.s32 1, %s19
      %s29 = scalar_select %p26, %s28, %s19
      %p30 = scmp.ge.s32.totalorder %s29, 2
      %s31 = scalar_select %p30, 0, %s29
      %s32 = ssub.s32 %s19, %s31
      %s33 = ssub.s32 %s20, %s27
      %s34 = sor.u32 %s32, %s33
      %p35 = scmp.eq.s32.totalorder %s34, 0
      %s37 = sadd.s32 %s36, 1
      %s38 = scalar_select %p35, %s36, %s37
      %p41 = pneg %p35
      %p42 = scmp.eq.s32.totalorder %s12, 1
      %p43 = por %p41, %p42
      %p44 = scmp.ne.s32.totalorder %s36, %s39
      %p45 = scmp.eq.s32.totalorder %s12, 0
      %p46 = por %p44, %p45
      %p47 = scmp.ne.s32.totalorder %s36, %s39
      %p48 = scmp.eq.s32.totalorder %s17, 1
      %p49 = por %p47, %p48
      %p50 = scmp.ne.s32.totalorder %s39, %s40
      %p51 = scmp.eq.s32.totalorder %s17, 0
      %p52 = por %p50, %p51
      %p53 = scmp.ne.s32.totalorder %s39, %s40
      %p54 = scmp.eq.s32.totalorder %s18, 1
      %p55 = por %p53, %p54
      %p57 = scmp.ne.s32.totalorder %s40, %s56
      %p58 = scmp.eq.s32.totalorder %s18, 0
      %p59 = por %p57, %p58
      %s61 = sadd.s32 %s60, 1
      %p64 = scmp.eq.s32.totalorder %s12, 1
      %p65 = scmp.ne.s32.totalorder %s60, %s62
      %p66 = scmp.eq.s32.totalorder %s12, 0
      %p67 = por %p65, %p66
      %p68 = scmp.ne.s32.totalorder %s60, %s62
      %p69 = scmp.eq.s32.totalorder %s17, 1
      %p70 = por %p68, %p69
      %p71 = scmp.ne.s32.totalorder %s62, %s63
      %p72 = scmp.eq.s32.totalorder %s17, 0
      %p73 = por %p71, %p72
      %p74 = scmp.ne.s32.totalorder %s62, %s63
      %p75 = scmp.eq.s32.totalorder %s18, 1
      %p76 = por %p74, %p75
      %p78 = scmp.ne.s32.totalorder %s63, %s77
      %p79 = scmp.eq.s32.totalorder %s18, 0
      %p80 = por %p78, %p79
      %s82 = sadd.s32 %s81, 1
      %p85 = scmp.eq.s32.totalorder %s12, 1
      %p86 = scmp.ne.s32.totalorder %s81, %s83
      %p87 = scmp.eq.s32.totalorder %s12, 0
      %p88 = por %p86, %p87
      %p89 = scmp.ne.s32.totalorder %s81, %s83
      %p90 = scmp.eq.s32.totalorder %s17, 1
      %p91 = por %p89, %p90
      %p92 = scmp.ne.s32.totalorder %s83, %s84
      %p93 = scmp.eq.s32.totalorder %s17, 0
      %p94 = por %p92, %p93
      %p95 = scmp.ne.s32.totalorder %s83, %s84
      %p96 = scmp.eq.s32.totalorder %s18, 1
      %p97 = por %p95, %p96
      %p99 = scmp.ne.s32.totalorder %s84, %s98
      %p100 = scmp.eq.s32.totalorder %s18, 0
      %p101 = por %p99, %p100
      %s102 = ssub.s32 %s19, %s31
      %s103 = ssub.s32 %s20, %s27
      %s104 = sor.u32 %s102, %s103
      %p105 = scmp.eq.s32.totalorder %s104, 0
      %s107 = sadd.s32 %s106, 1
      %s108 = scalar_select %p105, %s106, %s107
      %p111 = pneg %p105
      %p112 = scmp.eq.s32.totalorder %s12, 1
      %p113 = por %p111, %p112
      %p114 = scmp.ne.s32.totalorder %s106, %s109
      %p115 = scmp.eq.s32.totalorder %s12, 0
      %p116 = por %p114, %p115
      %p117 = scmp.ne.s32.totalorder %s106, %s109
      %p118 = scmp.eq.s32.totalorder %s17, 1
      %p119 = por %p117, %p118
      %p120 = scmp.ne.s32.totalorder %s109, %s110
      %p121 = scmp.eq.s32.totalorder %s17, 0
      %p122 = por %p120, %p121
      %p123 = scmp.ne.s32.totalorder %s109, %s110
      %p124 = scmp.eq.s32.totalorder %s18, 1
      %p125 = por %p123, %p124
      %p127 = scmp.ne.s32.totalorder %s110, %s126
      %p128 = scmp.eq.s32.totalorder %s18, 0
      %p129 = por %p127, %p128
      %p130 = scmp.le.s32.totalorder 1, %s12
      %p131 = scmp.lt.s32.totalorder %s12, 3
      %p132 = pnand %p130, %p131
      %p133 = pneg %p132
      // Predicated region
      $region9: #{tpu_custom_call.1} parent=5 // pred_check
        _
      $region10: #{tpu_custom_call.1} parent=5 // pred_check_branch
        %135 = sbr.rel (%p132) target = $region12
      $region11: #{tpu_custom_call.1} parent=5 // pred_region
        %s136 = ssub.s32 %s12, 1
        // Predicated region
        $region13: #{tpu_custom_call.1} parent=11 // pred_check
          %p137 = pneg %p73
        $region14: #{tpu_custom_call.1} parent=11 // pred_check_branch
          %139 = sbr.rel (%p137) target = $region16
        $region15: #{tpu_custom_call.1} parent=11 // pred_region
          _
        $region16: #{tpu_custom_call.1} parent=11 // pred_fallthru
          _
        // Predicated region
        $region17: #{tpu_custom_call.1} parent=11 // pred_check
          %p140 = pneg %p94
        $region18: #{tpu_custom_call.1} parent=11 // pred_check_branch
          %142 = sbr.rel (%p140) target = $region20
        $region19: #{tpu_custom_call.1} parent=11 // pred_region
          _
        $region20: #{tpu_custom_call.1} parent=11 // pred_fallthru
          _
      $region12: #{tpu_custom_call.1} parent=5 // pred_fallthru
        _
      %p143 = scmp.lt.s32.totalorder %s12, 2
      // Predicated region
      $region21: #{tpu_custom_call.1} parent=5 // pred_check
        %p144 = pneg %p143
      $region22: #{tpu_custom_call.1} parent=5 // pred_check_branch
        %146 = sbr.rel (%p144) target = $region24
      $region23: #{tpu_custom_call.1} parent=5 // pred_region
        // Predicated region
        $region25: #{tpu_custom_call.1} parent=23 // pred_check
          %p147 = pneg %p46
        $region26: #{tpu_custom_call.1} parent=23 // pred_check_branch
          %149 = sbr.rel (%p147) target = $region28
        $region27: #{tpu_custom_call.1} parent=23 // pred_region
          %p150 = scmp.lt.s32.totalorder %s19, 1
          %s151 = scalar_select %p150, %s19, 1
          %p152 = scmp.lt.s32.totalorder %s20, 0
          %s153 = scalar_select %p152, %s20, 0
          %s154 = smul.addr %s151, 2
          %s155 = sadd.s32 %s153, %s154
          %s156 = smul.addr %s155, 4
          %s157 = scalar_lea.vmem %s0, %s156
        $region28: #{tpu_custom_call.1} parent=23 // pred_fallthru
          _
      $region24: #{tpu_custom_call.1} parent=5 // pred_fallthru
        _
      %p158 = scmp.le.s32.totalorder 1, %s12
      %p159 = scmp.lt.s32.totalorder %s12, 3
      %p160 = pnand %p158, %p159
      %p161 = pneg %p160
      // Predicated region
      $region29: #{tpu_custom_call.1} parent=5 // pred_check
        _
      $region30: #{tpu_custom_call.1} parent=5 // pred_check_branch
        %163 = sbr.rel (%p160) target = $region32
      $region31: #{tpu_custom_call.1} parent=5 // pred_region
        %s164 = ssub.s32 %s12, 1
        %p165 = scmp.lt.s32.totalorder %s21, 1
        %s166 = scalar_select %p165, %s21, 1
        %p167 = scmp.lt.s32.totalorder %s22, 0
        %s168 = scalar_select %p167, %s22, 0
        %s169 = smul.addr %s166, 2
        %s170 = sadd.s32 %s168, %s169
        %s171 = smul.addr %s170, 4
        %s172 = scalar_lea.vmem %s0, %s171
        %p173 = pneg %p52
        %p174 = pneg %p49
        %p175 = pneg %p73
        %p176 = pneg %p70
        %p177 = pneg %p94
        %p178 = pneg %p91
        %p179 = pneg %p122
        %p180 = pneg %p119
        %s181 = sand.u32 %s109, 1
        %s182 = scalar_lea.sflag [#allocation3], %s181
        %s183 = sand.u32 %s109, 1
        %s184 = smul.addr %s183, 32
        %s185 = scalar_lea.vmem [#allocation2], %s184
        %p186 = scmp.lt.s32.totalorder %s21, 1
        %s187 = scalar_select %p186, %s21, 1
        %p188 = scmp.lt.s32.totalorder %s22, 0
        %s189 = scalar_select %p188, %s22, 0
        %s190 = smul.addr %s187, 2
        %s191 = sadd.s32 %s189, %s190
        %s192 = smul.addr %s191, 4
        %s193 = scalar_lea.vmem %s0, %s192
        %v195 = vld [vmem:[%s1] sm:$0xf]
        %v196 = vld [vmem:[%s1 + $0x4] sm:$0xf]
        %v197 = vld [vmem:[%s1 + $0x8] sm:$0xf]
        %v198 = vld [vmem:[%s1 + $0xc] sm:$0xf]
        %v199 = vld [vmem:[%s1 + $0x10] sm:$0xf]
        %v200 = vld [vmem:[%s1 + $0x14] sm:$0xf]
        %v201 = vld [vmem:[%s1 + $0x18] sm:$0xf]
        %v202 = vld [vmem:[%s1 + $0x1c] sm:$0xf]
        %v203 = vld [vmem:[%s1 + $0x20] sm:$0xf]
        %v204 = vld [vmem:[%s1 + $0x24] sm:$0xf]
        %v205 = vld [vmem:[%s1 + $0x28] sm:$0xf]
        %v206 = vld [vmem:[%s1 + $0x2c] sm:$0xf]
        %v207 = vld [vmem:[%s1 + $0x30] sm:$0xf]
        %v208 = vld [vmem:[%s1 + $0x34] sm:$0xf]
        %v209 = vld [vmem:[%s1 + $0x38] sm:$0xf]
        %v210 = vld [vmem:[%s1 + $0x3c] sm:$0xf]
        %v211 = vld [vmem:[%s1 + $0x40] sm:$0xf]
        %v212 = vld [vmem:[%s1 + $0x44] sm:$0xf]
        %v213 = vld [vmem:[%s1 + $0x48] sm:$0xf]
        %v214 = vld [vmem:[%s1 + $0x4c] sm:$0xf]
        %v215 = vld [vmem:[%s1 + $0x50] sm:$0xf]
        %v216 = vld [vmem:[%s1 + $0x54] sm:$0xf]
        %v217 = vld [vmem:[%s1 + $0x58] sm:$0xf]
        %v218 = vld [vmem:[%s1 + $0x5c] sm:$0xf]
        %v219 = vld [vmem:[%s1 + $0x60] sm:$0xf]
        %v220 = vld [vmem:[%s1 + $0x64] sm:$0xf]
        %v221 = vld [vmem:[%s1 + $0x68] sm:$0xf]
        %v222 = vld [vmem:[%s1 + $0x6c] sm:$0xf]
        %v223 = vld [vmem:[%s1 + $0x70] sm:$0xf]
        %v224 = vld [vmem:[%s1 + $0x74] sm:$0xf]
        %v225 = vld [vmem:[%s1 + $0x78] sm:$0xf]
        %v226 = vld [vmem:[%s1 + $0x7c] sm:$0xf]
        %v227 = vld [vmem:[%s193] sm:$0xf]
        %v228 = vld [vmem:[%s193 + $0x4] sm:$0xf]
        %v261 = vunpack.c.l.b16 %v195
        %v262 = vunpack.c.l.b16 %v196
        %v263 = vunpack.c.l.b16 %v197
        %v264 = vunpack.c.l.b16 %v198
        %v265 = vunpack.c.l.b16 %v199
        %v266 = vunpack.c.l.b16 %v200
        %v267 = vunpack.c.l.b16 %v201
        %v268 = vunpack.c.l.b16 %v202
        %v269 = vunpack.c.l.b16 %v203
        %v270 = vunpack.c.l.b16 %v204
        %v271 = vunpack.c.l.b16 %v205
        %v272 = vunpack.c.l.b16 %v206
        %v273 = vunpack.c.l.b16 %v207
        %v274 = vunpack.c.l.b16 %v208
        %v275 = vunpack.c.l.b16 %v209
        %v276 = vunpack.c.l.b16 %v210
        %v277 = vunpack.c.l.b16 %v211
        %v278 = vunpack.c.l.b16 %v212
        %v279 = vunpack.c.l.b16 %v213
        %v280 = vunpack.c.l.b16 %v214
        %v281 = vunpack.c.l.b16 %v215
        %v282 = vunpack.c.l.b16 %v216
        %v283 = vunpack.c.l.b16 %v217
        %v284 = vunpack.c.l.b16 %v218
        %v285 = vunpack.c.l.b16 %v219
        %v286 = vunpack.c.l.b16 %v220
        %v287 = vunpack.c.l.b16 %v221
        %v288 = vunpack.c.l.b16 %v222
        %v289 = vunpack.c.l.b16 %v223
        %v290 = vunpack.c.l.b16 %v224
        %v291 = vunpack.c.l.b16 %v225
        %v292 = vunpack.c.l.b16 %v226
        %v293 = vpack.c.b16 %v262, %v261
        %v294 = vpack.c.b16 %v264, %v263
        %v295 = vpack.c.b16 %v266, %v265
        %v296 = vpack.c.b16 %v268, %v267
        %v297 = vpack.c.b16 %v270, %v269
        %v298 = vpack.c.b16 %v272, %v271
        %v299 = vpack.c.b16 %v274, %v273
        %v300 = vpack.c.b16 %v276, %v275
        %v301 = vpack.c.b16 %v278, %v277
        %v302 = vpack.c.b16 %v280, %v279
        %v303 = vpack.c.b16 %v282, %v281
        %v304 = vpack.c.b16 %v284, %v283
        %v305 = vpack.c.b16 %v286, %v285
        %v306 = vpack.c.b16 %v288, %v287
        %v307 = vpack.c.b16 %v290, %v289
        %v308 = vpack.c.b16 %v292, %v291
        %v311 = vunpack.c.l.b16 %v227
        %v312 = vunpack.c.l.b16 %v228
        %v313 = vpack.c.b16 %v312, %v311
        %vm315 = vcmask 130048
        %v317 = vsel %vm315, %v293, 0
        %v320 = vsel %vm315, %v294, 0
        %v323 = vsel %vm315, %v295, 0
        %v326 = vsel %vm315, %v296, 0
        %v329 = vsel %vm315, %v297, 0
        %v332 = vsel %vm315, %v298, 0
        %v335 = vsel %vm315, %v299, 0
        %v338 = vsel %vm315, %v300, 0
        %v341 = vsel %vm315, %v301, 0
        %v344 = vsel %vm315, %v302, 0
        %v347 = vsel %vm315, %v303, 0
        %v350 = vsel %vm315, %v304, 0
        %v353 = vsel %vm315, %v305, 0
        %v356 = vsel %vm315, %v306, 0
        %v359 = vsel %vm315, %v307, 0
        %v362 = vsel %vm315, %v308, 0
        %364 = vmatprep.subr.bf16.mxu0 0
        %365 = vmatpush1.bf16.msra.mxu0 %v313
        %366 = vmatprep.subr.bf16.mxu0 0
        %367 = vmatpush1.bf16.msra.mxu0 0
        %368 = vmatprep.subr.bf16.mxu0 0
        %369 = vmatpush1.bf16.msra.mxu0 0
        %370 = vmatprep.subr.bf16.mxu0 0
        %371 = vmatpush1.bf16.msra.mxu0 0
        %372 = vmatprep.subr.bf16.mxu0 0
        %373 = vmatpush1.bf16.msra.mxu0 0
        %374 = vmatprep.subr.bf16.mxu0 0
        %375 = vmatpush1.bf16.msra.mxu0 0
        %376 = vmatprep.subr.bf16.mxu0 0
        %377 = vmatpush1.bf16.msra.mxu0 0
        %378 = vmatprep.subr.bf16.mxu0 0
        %379 = vmatpush1.bf16.msra.mxu0 0
        %380 = vmatprep.subr.bf16.mxu0 0
        %381 = vmatpush1.bf16.msra.mxu0 0
        %382 = vmatprep.subr.bf16.mxu0 0
        %383 = vmatpush1.bf16.msra.mxu0 0
        %384 = vmatprep.subr.bf16.mxu0 0
        %385 = vmatpush1.bf16.msra.mxu0 0
        %386 = vmatprep.subr.bf16.mxu0 0
        %387 = vmatpush1.bf16.msra.mxu0 0
        %388 = vmatprep.subr.bf16.mxu0 0
        %389 = vmatpush1.bf16.msra.mxu0 0
        %390 = vmatprep.subr.bf16.mxu0 0
        %391 = vmatpush1.bf16.msra.mxu0 0
        %392 = vmatprep.subr.bf16.mxu0 0
        %393 = vmatpush1.bf16.msra.mxu0 0
        %394 = vmatprep.subr.bf16.mxu0 0
        %395 = vmatpush1.bf16.msra.mxu0 0
        %396 = vmatprep.mubr.bf16.mxu0 0
        %397 = vmatmul.mubr.bf16.gmra.mrb[0].mxu0 %v317
        %v398 = vpop.f32.mrb[0].mxu0
        %v399 = vadd.f32 0.0, %v398
        %v400 = vpop.f32.mrb[0].mxu0
        %v401 = vpop.f32.mrb[0].mxu0
        %v402 = vadd.f32 0.0, %v401
        %v403 = vpop.f32.mrb[0].mxu0
        %404 = vmatprep.mubr.bf16.mxu0 0
        %405 = vmatmul.mubr.bf16.gmra.mrb[0].mxu0 %v320
        %v406 = vpop.f32.mrb[0].mxu0
        %v407 = vadd.f32 0.0, %v406
        %v408 = vpop.f32.mrb[0].mxu0
        %v409 = vpop.f32.mrb[0].mxu0
        %v410 = vadd.f32 0.0, %v409
        %v411 = vpop.f32.mrb[0].mxu0
        %412 = vmatprep.mubr.bf16.mxu0 0
        %413 = vmatmul.mubr.bf16.gmra.mrb[0].mxu0 %v323
        %v414 = vpop.f32.mrb[0].mxu0
        %v415 = vadd.f32 0.0, %v414
        %v416 = vpop.f32.mrb[0].mxu0
        %v417 = vpop.f32.mrb[0].mxu0
        %v418 = vadd.f32 0.0, %v417
        %v419 = vpop.f32.mrb[0].mxu0
        %420 = vmatprep.mubr.bf16.mxu0 0
        %421 = vmatmul.mubr.bf16.gmra.mrb[0].mxu0 %v326
        %v422 = vpop.f32.mrb[0].mxu0
        %v423 = vadd.f32 0.0, %v422
        %v424 = vpop.f32.mrb[0].mxu0
        %v425 = vpop.f32.mrb[0].mxu0
        %v426 = vadd.f32 0.0, %v425
        %v427 = vpop.f32.mrb[0].mxu0
        %428 = vmatprep.mubr.bf16.mxu0 0
        %429 = vmatmul.mubr.bf16.gmra.mrb[0].mxu0 %v329
        %v430 = vpop.f32.mrb[0].mxu0
        %v431 = vadd.f32 0.0, %v430
        %v432 = vpop.f32.mrb[0].mxu0
        %v433 = vpop.f32.mrb[0].mxu0
        %v434 = vadd.f32 0.0, %v433
        %v435 = vpop.f32.mrb[0].mxu0
        %436 = vmatprep.mubr.bf16.mxu0 0
        %437 = vmatmul.mubr.bf16.gmra.mrb[0].mxu0 %v332
        %v438 = vpop.f32.mrb[0].mxu0
        %v439 = vadd.f32 0.0, %v438
        %v440 = vpop.f32.mrb[0].mxu0
        %v441 = vpop.f32.mrb[0].mxu0
        %v442 = vadd.f32 0.0, %v441
        %v443 = vpop.f32.mrb[0].mxu0
        %444 = vmatprep.mubr.bf16.mxu0 0
        %445 = vmatmul.mubr.bf16.gmra.mrb[0].mxu0 %v335
        %v446 = vpop.f32.mrb[0].mxu0
        %v447 = vadd.f32 0.0, %v446
        %v448 = vpop.f32.mrb[0].mxu0
        %v449 = vpop.f32.mrb[0].mxu0
        %v450 = vadd.f32 0.0, %v449
        %v451 = vpop.f32.mrb[0].mxu0
        %452 = vmatprep.mubr.bf16.mxu0 0
        %453 = vmatmul.mubr.bf16.gmra.mrb[0].mxu0 %v338
        %v454 = vpop.f32.mrb[0].mxu0
        %v455 = vadd.f32 0.0, %v454
        %v456 = vpop.f32.mrb[0].mxu0
        %v457 = vpop.f32.mrb[0].mxu0
        %v458 = vadd.f32 0.0, %v457
        %v459 = vpop.f32.mrb[0].mxu0
        %460 = vmatprep.mubr.bf16.mxu0 0
        %461 = vmatmul.mubr.bf16.gmra.mrb[0].mxu0 %v341
        %v462 = vpop.f32.mrb[0].mxu0
        %v463 = vadd.f32 0.0, %v462
        %v464 = vpop.f32.mrb[0].mxu0
        %v465 = vpop.f32.mrb[0].mxu0
        %v466 = vadd.f32 0.0, %v465
        %v467 = vpop.f32.mrb[0].mxu0
        %468 = vmatprep.mubr.bf16.mxu0 0
        %469 = vmatmul.mubr.bf16.gmra.mrb[0].mxu0 %v344
        %v470 = vpop.f32.mrb[0].mxu0
        %v471 = vadd.f32 0.0, %v470
        %v472 = vpop.f32.mrb[0].mxu0
        %v473 = vpop.f32.mrb[0].mxu0
        %v474 = vadd.f32 0.0, %v473
        %v475 = vpop.f32.mrb[0].mxu0
        %476 = vmatprep.mubr.bf16.mxu0 0
        %477 = vmatmul.mubr.bf16.gmra.mrb[0].mxu0 %v347
        %v478 = vpop.f32.mrb[0].mxu0
        %v479 = vadd.f32 0.0, %v478
        %v480 = vpop.f32.mrb[0].mxu0
        %v481 = vpop.f32.mrb[0].mxu0
        %v482 = vadd.f32 0.0, %v481
        %v483 = vpop.f32.mrb[0].mxu0
        %484 = vmatprep.mubr.bf16.mxu0 0
        %485 = vmatmul.mubr.bf16.gmra.mrb[0].mxu0 %v350
        %v486 = vpop.f32.mrb[0].mxu0
        %v487 = vadd.f32 0.0, %v486
        %v488 = vpop.f32.mrb[0].mxu0
        %v489 = vpop.f32.mrb[0].mxu0
        %v490 = vadd.f32 0.0, %v489
        %v491 = vpop.f32.mrb[0].mxu0
        %492 = vmatprep.mubr.bf16.mxu0 0
        %493 = vmatmul.mubr.bf16.gmra.mrb[0].mxu0 %v353
        %v494 = vpop.f32.mrb[0].mxu0
        %v495 = vadd.f32 0.0, %v494
        %v496 = vpop.f32.mrb[0].mxu0
        %v497 = vpop.f32.mrb[0].mxu0
        %v498 = vadd.f32 0.0, %v497
        %v499 = vpop.f32.mrb[0].mxu0
        %500 = vmatprep.mubr.bf16.mxu0 0
        %501 = vmatmul.mubr.bf16.gmra.mrb[0].mxu0 %v356
        %v502 = vpop.f32.mrb[0].mxu0
        %v503 = vadd.f32 0.0, %v502
        %v504 = vpop.f32.mrb[0].mxu0
        %v505 = vpop.f32.mrb[0].mxu0
        %v506 = vadd.f32 0.0, %v505
        %v507 = vpop.f32.mrb[0].mxu0
        %508 = vmatprep.mubr.bf16.mxu0 0
        %509 = vmatmul.mubr.bf16.gmra.mrb[0].mxu0 %v359
        %v510 = vpop.f32.mrb[0].mxu0
        %v511 = vadd.f32 0.0, %v510
        %v512 = vpop.f32.mrb[0].mxu0
        %v513 = vpop.f32.mrb[0].mxu0
        %v514 = vadd.f32 0.0, %v513
        %v515 = vpop.f32.mrb[0].mxu0
        %516 = vmatprep.mubr.bf16.mxu0 0
        %517 = vmatmul.mubr.bf16.gmra.mrb[0].mxu0 %v362
        %v518 = vpop.f32.mrb[0].mxu0
        %v519 = vadd.f32 0.0, %v518
        %v520 = vpop.f32.mrb[0].mxu0
        %v521 = vpop.f32.mrb[0].mxu0
        %v522 = vadd.f32 0.0, %v521
        %v523 = vpop.f32.mrb[0].mxu0
        %524 = vdwg.mxu0
        %v525 = vmax.f32 %v399, %v431
        %v526 = vmax.f32 %v402, %v434
        %v527 = vmax.f32 %v407, %v439
        %v528 = vmax.f32 %v410, %v442
        %v529 = vmax.f32 %v415, %v447
        %v530 = vmax.f32 %v418, %v450
        %v531 = vmax.f32 %v423, %v455
        %v532 = vmax.f32 %v426, %v458
        %v533 = vmax.f32 %v463, %v495
        %v534 = vmax.f32 %v466, %v498
        %v535 = vmax.f32 %v471, %v503
        %v536 = vmax.f32 %v474, %v506
        %v537 = vmax.f32 %v479, %v511
        %v538 = vmax.f32 %v482, %v514
        %v539 = vmax.f32 %v487, %v519
        %v540 = vmax.f32 %v490, %v522
        %v541 = vmax.f32 %v525, %v533
        %v542 = vmax.f32 %v526, %v534
        %v543 = vmax.f32 %v527, %v535
        %v544 = vmax.f32 %v528, %v536
        %v545 = vmax.f32 %v529, %v537
        %v546 = vmax.f32 %v530, %v538
        %v547 = vmax.f32 %v531, %v539
        %v548 = vmax.f32 %v532, %v540
        %v549 = vld [vmem:[%s2] sm:$0xff]
        %v550 = vld [vmem:[%s2 + $0x8] sm:$0xff]
        %v551 = vld [vmem:[%s2 + $0x10] sm:$0xff]
        %v552 = vld [vmem:[%s2 + $0x18] sm:$0xff]
        %v553 = vld [vmem:[%s2 + $0x20] sm:$0xff]
        %v554 = vld [vmem:[%s2 + $0x28] sm:$0xff]
        %v555 = vld [vmem:[%s2 + $0x30] sm:$0xff]
        %v556 = vld [vmem:[%s2 + $0x38] sm:$0xff]
        %558 = vset.pattern.permute.xlu0 0
        %559 = vperm.xlu0 %558, %v549
        %v560 = vpop.permute.xlu0 %559
        %563 = vset.pattern.permute.xlu0 0
        %564 = vperm.xlu0 %563, %v550
        %v565 = vpop.permute.xlu0 %564
        %568 = vset.pattern.permute.xlu0 0
        %569 = vperm.xlu0 %568, %v551
        %v570 = vpop.permute.xlu0 %569
        %573 = vset.pattern.permute.xlu0 0
        %574 = vperm.xlu0 %573, %v552
        %v575 = vpop.permute.xlu0 %574
        %578 = vset.pattern.permute.xlu0 0
        %579 = vperm.xlu0 %578, %v553
        %v580 = vpop.permute.xlu0 %579
        %583 = vset.pattern.permute.xlu0 0
        %584 = vperm.xlu0 %583, %v554
        %v585 = vpop.permute.xlu0 %584
        %588 = vset.pattern.permute.xlu0 0
        %589 = vperm.xlu0 %588, %v555
        %v590 = vpop.permute.xlu0 %589
        %593 = vset.pattern.permute.xlu0 0
        %594 = vperm.xlu0 %593, %v556
        %v595 = vpop.permute.xlu0 %594
        %v597 = vadd.f32 %v541, %v560
        %v598 = vadd.f32 %v542, %v565
        %v599 = vadd.f32 %v543, %v570
        %v600 = vadd.f32 %v544, %v575
        %v601 = vadd.f32 %v545, %v580
        %v602 = vadd.f32 %v546, %v585
        %v603 = vadd.f32 %v547, %v590
        %v604 = vadd.f32 %v548, %v595
        %v605 = vmax.f32 %v597, 0.0
        %v606 = vmax.f32 %v598, 0.0
        %v607 = vmax.f32 %v599, 0.0
        %v608 = vmax.f32 %v600, 0.0
        %v609 = vmax.f32 %v601, 0.0
        %v610 = vmax.f32 %v602, 0.0
        %v611 = vmax.f32 %v603, 0.0
        %v612 = vmax.f32 %v604, 0.0
        %v613 = vpack.c.bf16 %v606, %v605
        %v614 = vpack.c.bf16 %v608, %v607
        %v615 = vpack.c.bf16 %v610, %v609
        %v616 = vpack.c.bf16 %v612, %v611
        %v621 = vunpack.c.l.b16 %v613
        %v622 = vunpack.c.h.b16 %v613
        %v623 = vunpack.c.l.b16 %v614
        %v624 = vunpack.c.h.b16 %v614
        %v625 = vunpack.c.l.b16 %v615
        %v626 = vunpack.c.h.b16 %v615
        %v627 = vunpack.c.l.b16 %v616
        %v628 = vunpack.c.h.b16 %v616
        %v629 = vpack.c.b16 %v621, %v621
        %v630 = vpack.c.b16 %v622, %v622
        %v631 = vpack.c.b16 %v623, %v623
        %v632 = vpack.c.b16 %v624, %v624
        %v633 = vpack.c.b16 %v625, %v625
        %v634 = vpack.c.b16 %v626, %v626
        %v635 = vpack.c.b16 %v627, %v627
        %v636 = vpack.c.b16 %v628, %v628
        %vm645 = vcmask 519168
        %646 = vst.msk [vmem:[%s185] sm:$0xf] %vm645, %v629
        %647 = vst.msk [vmem:[%s185 + $0x4] sm:$0xf] %vm645, %v630
        %648 = vst.msk [vmem:[%s185 + $0x8] sm:$0xf] %vm645, %v631
        %649 = vst.msk [vmem:[%s185 + $0xc] sm:$0xf] %vm645, %v632
        %650 = vst.msk [vmem:[%s185 + $0x10] sm:$0xf] %vm645, %v633
        %651 = vst.msk [vmem:[%s185 + $0x14] sm:$0xf] %vm645, %v634
        %652 = vst.msk [vmem:[%s185 + $0x18] sm:$0xf] %vm645, %v635
        %653 = vst.msk [vmem:[%s185 + $0x1c] sm:$0xf] %vm645, %v636
        %s654 = sand.u32 %s109, 1
        %s655 = scalar_lea.sflag [#allocation3], %s654
        %s656 = sand.u32 %s109, 1
        %s657 = smul.addr %s656, 32
        %s658 = scalar_lea.vmem [#allocation2], %s657
        // Predicated region
        $region33: #{tpu_custom_call.1} parent=31 // pred_check
          %p659 = pneg %p119
        $region34: #{tpu_custom_call.1} parent=31 // pred_check_branch
          %661 = sbr.rel (%p659) target = $region36
        $region35: #{tpu_custom_call.1} parent=31 // pred_region
          %s663 = ssub.s32 512, 512
          %664 = vsyncadd %s655, %s663
          %s665 = smul.addr %s21, 8
          %s666 = sadd.s32 %s22, %s665
          %s667 = smul.addr %s666, 64
          %s668 = scalar_lea.hbm %s3, %s667
          %s669 = sshll.u32 %s658, 4
          %s670 = int_to_ptr.vmem [resolvable:$true] %s669
          %675 = dma.vmem_to_hbm [thread:$0]  %s670, 512, %s668, %s655, 64, 64, 4
        $region36: #{tpu_custom_call.1} parent=31 // pred_fallthru
          _
      $region32: #{tpu_custom_call.1} parent=5 // pred_fallthru
        _
      %p676 = scmp.le.s32.totalorder 2, %s12
      // Predicated region
      $region37: #{tpu_custom_call.1} parent=5 // pred_check
        %p677 = pneg %p676
      $region38: #{tpu_custom_call.1} parent=5 // pred_check_branch
        %679 = sbr.rel (%p677) target = $region40
      $region39: #{tpu_custom_call.1} parent=5 // pred_region
        %s680 = ssub.s32 %s12, 2
        // Predicated region
        $region41: #{tpu_custom_call.1} parent=39 // pred_check
          %p681 = pneg %p125
        $region42: #{tpu_custom_call.1} parent=39 // pred_check_branch
          %683 = sbr.rel (%p681) target = $region44
        $region43: #{tpu_custom_call.1} parent=39 // pred_region
          %s684 = sand.u32 %s110, 1
          %s685 = scalar_lea.sflag [#allocation3], %s684
          %s686 = sand.u32 %s110, 1
          %s687 = smul.addr %s686, 32
          %s688 = scalar_lea.vmem [#allocation2], %s687
          %689 = dma.done %s685, 512
        $region44: #{tpu_custom_call.1} parent=39 // pred_fallthru
          _
      $region40: #{tpu_custom_call.1} parent=5 // pred_fallthru
        _
    $region6: #{tpu_custom_call.1} parent=1 // loop_footer
      %s16 = sadd.s32 1, %s12
    $region7: #{tpu_custom_call.1} parent=1 // loop_footer_branch
      %11 = sbr.rel target = $region3
    $region8: #{tpu_custom_call.1} parent=1 // loop_exit
      _
    %690 = vsyncpa [#allocation3], 1
    %s691 = scalar_lea.sflag [#allocation3], 1
    %692 = vsyncpa %s691, 1

</llo_original>
